<compile_context>
chip_gen: v5e
topology: v5e:2x2
jax: 0.10.0
libtpu: 0.0.40
codegen_flags: <defaults>
</compile_context>

<pallas_src>
import functools
import math

import jax
import jax.numpy as jnp
from jax.experimental import pallas as pl
from jax.experimental.pallas import tpu as pltpu


LANE = 128   # slab lane width == padded fan_in/fan_out per layer (one lane tile)
SUB = 16     # sublane alignment of the bias block (bf16 packs 16 rows per vreg)


def _layer_layout(layer_dims):
    """Static row offsets of each (W, b) block inside the packed parameter slab.

    Each layer occupies LANE rows of weights (zero-padded past fan_in) followed by
    SUB rows whose first row holds the bias. All offsets are multiples of 16, so
    every in-kernel slice is bf16 sublane-tile aligned.
    """
    layout = []
    r = 0
    for din, dout in layer_dims:
        layout.append(dict(w_row=r, din=din, b_row=r + LANE, dout=dout))
        r += LANE + SUB
    return layout, r


# ----------------------------------------------------------------------------
# One-time parameter prepare step (hoisted out of the jitted forward).
# ----------------------------------------------------------------------------
def pack_params(params, param_dtype=jnp.bfloat16):
    """Pack every (W, b) into one (rows, 128) slab (single DMA, static in-kernel slices).

    params: list of (W: (fan_in, fan_out), b: (fan_out,)) in layer order.
    """
    layer_dims = tuple((int(w.shape[0]), int(w.shape[1])) for w, _ in params)
    for din, dout in layer_dims:
        assert din <= LANE and dout <= LANE, (
            "this packed-slab kernel assumes hidden_features and kernel_size**2 <= 128")
    layout, total_rows = _layer_layout(layer_dims)
    slab = jnp.zeros((total_rows, LANE), jnp.float32)
    for (w, b), lo in zip(params, layout):
        slab = slab.at[lo["w_row"]:lo["w_row"] + lo["din"], :lo["dout"]].set(w)
        slab = slab.at[lo["b_row"], :lo["dout"]].set(jnp.reshape(b, (-1,)))
    return slab.astype(param_dtype), layer_dims


# ----------------------------------------------------------------------------
# Fused MLP kernel: VPU first layer + bf16 MXU chain, all params from one slab.
# ----------------------------------------------------------------------------
def _make_mlp_kernel(layer_dims):
    assert layer_dims[0][0] == 2, "KernelPrediction's first Linear has 2 input features"
    layout, _ = _layer_layout(layer_dims)

    def kernel(x_ref, slab_ref, o_ref):
        f32 = jnp.float32
        pdt = slab_ref.dtype

        # ---- layer 0 on the VPU (contraction depth is only 2; skip the MXU) ----
        lo0 = layout[0]
        x = x_ref[...].astype(f32)                                           # (B, 2)
        w0a = slab_ref[lo0["w_row"]:lo0["w_row"] + 1, :].astype(f32)         # (1, 128)
        w0b = slab_ref[lo0["w_row"] + 1:lo0["w_row"] + 2, :].astype(f32)     # (1, 128)
        b0 = slab_ref[lo0["b_row"]:lo0["b_row"] + 1, :].astype(f32)          # (1, 128)
        h = x[:, 0:1] * w0a + x[:, 1:2] * w0b + b0                           # (B, 128)
        h = jnp.maximum(h, 0.0)                                              # ReLU

        # ---- remaining layers on the MXU: bf16 operands, f32 accumulation ----
        # W blocks are zero beyond fan_in rows / fan_out columns and h lanes beyond
        # the previous fan_out are exactly 0 (ReLU of 0), so contracting the full
        # 128x128 block is numerically exact and keeps every slice tile-aligned.
        for lo in layout[1:]:
            w = slab_ref[lo["w_row"]:lo["w_row"] + LANE, :]                  # (128, 128)
            b = slab_ref[lo["b_row"]:lo["b_row"] + 1, :].astype(f32)         # (1, 128)
            h = jnp.dot(h.astype(pdt), w, preferred_element_type=f32) + b    # (B, 128)
            h = jnp.maximum(h, 0.0)                                          # ReLU (incl. final)

        o_ref[...] = h[:, :o_ref.shape[-1]].astype(o_ref.dtype)

    return kernel


def kernel_prediction_forward(x, slab, layer_dims, kernel_size):
    """Forward pass. x: (B, 2) (or (2,)) -> (B, 1, K, K). B=1 matches torch view(1,1,K,K)."""
    if x.ndim == 1:
        x = x[None, :]
    B = x.shape[0]
    kk = kernel_size * kernel_size
    out = pl.pallas_call(
        _make_mlp_kernel(layer_dims),
        out_shape=jax.ShapeDtypeStruct((B, kk), jnp.float32),
        in_specs=[pl.BlockSpec(memory_space=pltpu.MemorySpace.VMEM),
                  pl.BlockSpec(memory_space=pltpu.MemorySpace.VMEM)],
        out_specs=pl.BlockSpec(memory_space=pltpu.MemorySpace.VMEM),
    )(x, slab)
    return out.reshape(B, 1, kernel_size, kernel_size)


# ----------------------------------------------------------------------------
# Deterministic init (matches PyTorch Linear default: U(-1/sqrt(in), 1/sqrt(in)))
# ----------------------------------------------------------------------------
def init_kernel_prediction_params(key, layers: int, hidden_features: int, kernel_size: int):
    assert layers > 2
    dims = [2] + [hidden_features] * (layers - 1) + [kernel_size * kernel_size]
    params = []
    for i in range(len(dims) - 1):
        fan_in, fan_out = dims[i], dims[i + 1]
        bound = 1.0 / math.sqrt(fan_in)
        key, kw, kb = jax.random.split(key, 3)
        w = jax.random.uniform(kw, (fan_in, fan_out), jnp.float32, -bound, bound)
        b = jax.random.uniform(kb, (fan_out,), jnp.float32, -bound, bound)
        params.append((w, b))
    return params


# ----------------------------------------------------------------------------
# Pure-JAX references
# ----------------------------------------------------------------------------
def reference_forward_f32(x, params, kernel_size: int):
    h = x
    for w, b in params:
        h = jnp.maximum(h @ w + b.reshape(1, -1), 0.0)
    return h.reshape(x.shape[0], 1, kernel_size, kernel_size)


def reference_forward_quantized(x, params, kernel_size: int, param_dtype=jnp.bfloat16):
    # Mirrors the kernel's numerics: params in param_dtype, f32 accumulation,
    # activations round-tripped through param_dtype before each MXU layer.
    h = x.astype(jnp.float32)
    for i, (w, b) in enumerate(params):
        wq = w.astype(param_dtype).astype(jnp.float32)
        bq = b.astype(param_dtype).astype(jnp.float32).reshape(1, -1)
        if i > 0:
            h = h.astype(param_dtype).astype(jnp.float32)
        h = jnp.maximum(h @ wq + bq, 0.0)
    return h.reshape(x.shape[0], 1, kernel_size, kernel_size)


if __name__ == "__main__":
    layers = 4            # must be > 2
    hidden_features = 32
    kernel_size = 4

    key = jax.random.PRNGKey(0)
    key, kx = jax.random.split(key)
    x = jax.random.normal(kx, (1, 2), jnp.float32)     # single jitter offset (module semantics)

    params = init_kernel_prediction_params(key, layers, hidden_features, kernel_size)
    slab, layer_dims = pack_params(params, param_dtype=jnp.bfloat16)   # one-time prepare

    fwd = jax.jit(functools.partial(kernel_prediction_forward,
                                    layer_dims=layer_dims, kernel_size=kernel_size))

    out = fwd(x, slab)
    jax.block_until_ready(out)
    assert out.shape == (1, 1, kernel_size, kernel_size)

    ref_q = reference_forward_quantized(x, params, kernel_size)
    ref_f = reference_forward_f32(x, params, kernel_size)
    assert jnp.allclose(out, ref_q, atol=1e-3, rtol=1e-3), "mismatch vs bf16-matched reference"
    assert jnp.allclose(out, ref_f, atol=5e-2, rtol=5e-2), "mismatch vs f32 reference"

    # Batched jitter offsets: B rows share one weight DMA and one MXU pass per layer.
    xb = jax.random.normal(jax.random.PRNGKey(1), (8, 2), jnp.float32)
    outb = jax.block_until_ready(fwd(xb, slab))
    refb = reference_forward_quantized(xb, params, kernel_size)
    assert outb.shape == (8, 1, kernel_size, kernel_size)
    assert jnp.allclose(outb, refb, atol=1e-3, rtol=1e-3), "batched mismatch"

    print("KERNEL_OK")
</pallas_src>

<mosaic_0001>
module attributes {stable_mosaic.version = 11 : i64} {
  func.func @kernel(%arg0: memref<1x2xf32, #tpu.memory_space<vmem>>, %arg1: memref<576x128xbf16, #tpu.memory_space<vmem>>, %arg2: memref<1x16xf32, #tpu.memory_space<vmem>>) attributes {dimension_semantics = [], scalar_prefetch = 0 : i64, scratch_operands = 0 : i64, tpu.core_type = #tpu.core_type<tc>} {
    %c0 = arith.constant 0 : index
    %c0_0 = arith.constant 0 : index
    %0 = vector.load %arg0[%c0, %c0_0] : memref<1x2xf32, #tpu.memory_space<vmem>>, vector<1x2xf32>
    %c0_1 = arith.constant 0 : index
    %c0_2 = arith.constant 0 : index
    %1 = vector.load %arg1[%c0_1, %c0_2] : memref<576x128xbf16, #tpu.memory_space<vmem>>, vector<1x128xbf16>
    %2 = arith.extf %1 : vector<1x128xbf16> to vector<1x128xf32>
    %c1 = arith.constant 1 : index
    %c0_3 = arith.constant 0 : index
    %3 = vector.load %arg1[%c1, %c0_3] : memref<576x128xbf16, #tpu.memory_space<vmem>>, vector<1x128xbf16>
    %4 = arith.extf %3 : vector<1x128xbf16> to vector<1x128xf32>
    %c128 = arith.constant 128 : index
    %c0_4 = arith.constant 0 : index
    %5 = vector.load %arg1[%c128, %c0_4] : memref<576x128xbf16, #tpu.memory_space<vmem>>, vector<1x128xbf16>
    %6 = arith.extf %5 : vector<1x128xbf16> to vector<1x128xf32>
    %7 = vector.extract_strided_slice %0 {offsets = [0, 0], sizes = [1, 1], strides = [1, 1]} : vector<1x2xf32> to vector<1x1xf32>
    %8 = vector.broadcast %7 : vector<1x1xf32> to vector<1x128xf32>
    %9 = arith.mulf %8, %2 : vector<1x128xf32>
    %10 = vector.extract_strided_slice %0 {offsets = [0, 1], sizes = [1, 1], strides = [1, 1]} : vector<1x2xf32> to vector<1x1xf32>
    %11 = vector.broadcast %10 : vector<1x1xf32> to vector<1x128xf32>
    %12 = arith.mulf %11, %4 : vector<1x128xf32>
    %13 = arith.addf %9, %12 : vector<1x128xf32>
    %14 = arith.addf %13, %6 : vector<1x128xf32>
    %cst = arith.constant 0.000000e+00 : f32
    %15 = vector.broadcast %cst : f32 to vector<1x128xf32>
    %16 = arith.maximumf %14, %15 : vector<1x128xf32>
    %c144 = arith.constant 144 : index
    %c0_5 = arith.constant 0 : index
    %17 = vector.load %arg1[%c144, %c0_5] : memref<576x128xbf16, #tpu.memory_space<vmem>>, vector<128x128xbf16>
    %c272 = arith.constant 272 : index
    %c0_6 = arith.constant 0 : index
    %18 = vector.load %arg1[%c272, %c0_6] : memref<576x128xbf16, #tpu.memory_space<vmem>>, vector<1x128xbf16>
    %19 = arith.extf %18 : vector<1x128xbf16> to vector<1x128xf32>
    %20 = arith.truncf %16 : vector<1x128xf32> to vector<1x128xbf16>
    %cst_7 = arith.constant dense<0.000000e+00> : vector<1x128xf32>
    %21 = tpu.matmul %20, %17, %cst_7 {dimension_numbers = #tpu.dot_dimension_numbers<[1], [0], [0], [1], [0, 0, 1, 1], [], []>} : vector<1x128xbf16>, vector<128x128xbf16>, vector<1x128xf32> -> vector<1x128xf32>
    %22 = arith.addf %21, %19 : vector<1x128xf32>
    %cst_8 = arith.constant 0.000000e+00 : f32
    %23 = vector.broadcast %cst_8 : f32 to vector<1x128xf32>
    %24 = arith.maximumf %22, %23 : vector<1x128xf32>
    %c288 = arith.constant 288 : index
    %c0_9 = arith.constant 0 : index
    %25 = vector.load %arg1[%c288, %c0_9] : memref<576x128xbf16, #tpu.memory_space<vmem>>, vector<128x128xbf16>
    %c416 = arith.constant 416 : index
    %c0_10 = arith.constant 0 : index
    %26 = vector.load %arg1[%c416, %c0_10] : memref<576x128xbf16, #tpu.memory_space<vmem>>, vector<1x128xbf16>
    %27 = arith.extf %26 : vector<1x128xbf16> to vector<1x128xf32>
    %28 = arith.truncf %24 : vector<1x128xf32> to vector<1x128xbf16>
    %cst_11 = arith.constant dense<0.000000e+00> : vector<1x128xf32>
    %29 = tpu.matmul %28, %25, %cst_11 {dimension_numbers = #tpu.dot_dimension_numbers<[1], [0], [0], [1], [0, 0, 1, 1], [], []>} : vector<1x128xbf16>, vector<128x128xbf16>, vector<1x128xf32> -> vector<1x128xf32>
    %30 = arith.addf %29, %27 : vector<1x128xf32>
    %cst_12 = arith.constant 0.000000e+00 : f32
    %31 = vector.broadcast %cst_12 : f32 to vector<1x128xf32>
    %32 = arith.maximumf %30, %31 : vector<1x128xf32>
    %c432 = arith.constant 432 : index
    %c0_13 = arith.constant 0 : index
    %33 = vector.load %arg1[%c432, %c0_13] : memref<576x128xbf16, #tpu.memory_space<vmem>>, vector<128x128xbf16>
    %c560 = arith.constant 560 : index
    %c0_14 = arith.constant 0 : index
    %34 = vector.load %arg1[%c560, %c0_14] : memref<576x128xbf16, #tpu.memory_space<vmem>>, vector<1x128xbf16>
    %35 = arith.extf %34 : vector<1x128xbf16> to vector<1x128xf32>
    %36 = arith.truncf %32 : vector<1x128xf32> to vector<1x128xbf16>
    %cst_15 = arith.constant dense<0.000000e+00> : vector<1x128xf32>
    %37 = tpu.matmul %36, %33, %cst_15 {dimension_numbers = #tpu.dot_dimension_numbers<[1], [0], [0], [1], [0, 0, 1, 1], [], []>} : vector<1x128xbf16>, vector<128x128xbf16>, vector<1x128xf32> -> vector<1x128xf32>
    %38 = arith.addf %37, %35 : vector<1x128xf32>
    %cst_16 = arith.constant 0.000000e+00 : f32
    %39 = vector.broadcast %cst_16 : f32 to vector<1x128xf32>
    %40 = arith.maximumf %38, %39 : vector<1x128xf32>
    %41 = vector.extract_strided_slice %40 {offsets = [0, 0], sizes = [1, 16], strides = [1, 1]} : vector<1x128xf32> to vector<1x16xf32>
    %c0_17 = arith.constant 0 : index
    %c0_18 = arith.constant 0 : index
    %42 = vector.load %arg2[%c0_17, %c0_18] : memref<1x16xf32, #tpu.memory_space<vmem>>, vector<1x16xf32>
    tpu.vector_store %arg2[%c0_17, %c0_18], %41 {strides = array<i32>} : memref<1x16xf32, #tpu.memory_space<vmem>>, vector<1x16xf32>,
    return
  }
}

</mosaic_0001>

<llo_original>
// kernel: kernel_prediction_forward.1
$region0: #{kernel_prediction_forward.1}
  #allocation0 [shape = 'u32[]', space=smem, size = 0x4, offset = 0x4, fixed_abs, tag = 'smem constant byte address 0x4 - core index']
  #allocation1 [shape = 'u32[72,128]{1,0:T(1,128)}', space=vmem, size = 0x9000, scoped, tag = 'internal scratch']
  %s0 = inlined_call_operand.hbm [shape: f32[1,2], index: 0, kind: input, shape index: {}]
  %s1 = inlined_call_operand.hbm [shape: bf16[576,128], index: 1, kind: input, shape index: {}]
  %s2 = inlined_call_operand.vmem [shape: f32[1,16], index: 2, kind: output, shape index: {}]
  %s3 = sld [smem:[#allocation0]]
  $region26: #{kernel_prediction_forward.1} parent=0
    _
  %s5 = ssub.s32 1, %s3
  %s6 = scalar_select 0, %s5, %s3
  $region1: #{kernel_prediction_forward.1} parent=0
    #allocation2 [shape = 'u8[512]{0}', space=vmem, size = 0x400, scoped, tag = 'input window, operand 0, single buffered']
    #allocation3 [shape = 's32[1]{0}', space=sflag, size = 0x4, scoped, tag = 'scoped memory for kernel_prediction_forward.1']
    #allocation4 [shape = 'u8[147456]{0}', space=vmem, size = 0x24000, scoped, tag = 'input window, operand 1, single buffered']
    #allocation5 [shape = 's32[1]{0}', space=sflag, size = 0x4, scoped, tag = 'scoped memory for kernel_prediction_forward.1']
    %7 = vsyncpa [#allocation3], 0
    %8 = vsyncpa [#allocation5], 0
    // Predicated region
    $region2: #{kernel_prediction_forward.1} parent=1 // pred_check
      _
    $region3: #{kernel_prediction_forward.1} parent=1 // pred_check_branch
      %10 = sbr.rel (0) target = $region5
    $region4: #{kernel_prediction_forward.1} parent=1 // pred_region
      %12 = vsyncadd [#allocation3], 0
      %s14 = sshll.u32 %s0, 4
      %s15 = int_to_ptr.hbm [resolvable:$true] %s14
      %s16 = sshll.u32 [#allocation2], 4
      %s17 = int_to_ptr.vmem [resolvable:$true] %s16
      %19 = dma.hbm_to_vmem [thread:$0]  %s15, 16, %s17, [#allocation3]
    $region5: #{kernel_prediction_forward.1} parent=1 // pred_fallthru
      _
    // Predicated region
    $region6: #{kernel_prediction_forward.1} parent=1 // pred_check
      _
    $region7: #{kernel_prediction_forward.1} parent=1 // pred_check_branch
      %21 = sbr.rel (0) target = $region9
    $region8: #{kernel_prediction_forward.1} parent=1 // pred_region
      %23 = vsyncadd [#allocation5], 0
      %s24 = sshll.u32 %s1, 4
      %s25 = int_to_ptr.hbm [resolvable:$true] %s24
      %s26 = sshll.u32 [#allocation4], 4
      %s27 = int_to_ptr.vmem [resolvable:$true] %s26
      %32 = dma.hbm_to_vmem [thread:$0]  %s25, 4608, %s27, [#allocation5], 64, 64, 4
    $region9: #{kernel_prediction_forward.1} parent=1 // pred_fallthru
      _
    // Predicated region
    $region10: #{kernel_prediction_forward.1} parent=1 // pred_check
      _
    $region11: #{kernel_prediction_forward.1} parent=1 // pred_check_branch
      %34 = sbr.rel (0) target = $region13
    $region12: #{kernel_prediction_forward.1} parent=1 // pred_region
      %36 = dma.done [#allocation3], 16
    $region13: #{kernel_prediction_forward.1} parent=1 // pred_fallthru
      _
    // Predicated region
    $region14: #{kernel_prediction_forward.1} parent=1 // pred_check
      _
    $region15: #{kernel_prediction_forward.1} parent=1 // pred_check_branch
      %38 = sbr.rel (0) target = $region17
    $region16: #{kernel_prediction_forward.1} parent=1 // pred_region
      %40 = dma.done [#allocation5], 4608
    $region17: #{kernel_prediction_forward.1} parent=1 // pred_fallthru
      _
    %v41 = vld [vmem:[#allocation2] sm:$0x1]
    %v42 = vld [vmem:[#allocation4] sm:$0x1]
    %v43 = vunpack.c.l.bf16 %v42
    %v44 = vld [vmem:[#allocation4 + $0x40] sm:$0x1]
    %v45 = vunpack.c.l.bf16 %v44
    %47 = vset.pattern.permute.xlu0 0
    %48 = vperm.xlu0 %47, %v41
    %v49 = vpop.permute.xlu0 %48
    %v51 = vperm.slane %v49, 0
    %v52 = vmul.f32 %v51, %v43
    %53 = vset.pattern.permute.xlu0 1
    %54 = vperm.xlu0 %53, %v41
    %v55 = vpop.permute.xlu0 %54
    %v57 = vperm.slane %v55, 0
    %v58 = vmul.f32 %v57, %v43
    %v60 = vrot.slane %v58, 1
    %v62 = vadd.f32 %v52, %v60
    %v63 = vadd.f32 %v62, %v45
    %v64 = vmax.f32 %v63, 0.0
    %v65 = vld [vmem:[#allocation4 + $0x48] sm:$0xf]
    %v66 = vld [vmem:[#allocation4 + $0x4c] sm:$0xf]
    %v67 = vld [vmem:[#allocation4 + $0x50] sm:$0xf]
    %v68 = vld [vmem:[#allocation4 + $0x54] sm:$0xf]
    %v69 = vld [vmem:[#allocation4 + $0x58] sm:$0xf]
    %v70 = vld [vmem:[#allocation4 + $0x5c] sm:$0xf]
    %v71 = vld [vmem:[#allocation4 + $0x60] sm:$0xf]
    %v72 = vld [vmem:[#allocation4 + $0x64] sm:$0xf]
    %v73 = vld [vmem:[#allocation4 + $0x68] sm:$0xf]
    %v74 = vld [vmem:[#allocation4 + $0x6c] sm:$0xf]
    %v75 = vld [vmem:[#allocation4 + $0x70] sm:$0xf]
    %v76 = vld [vmem:[#allocation4 + $0x74] sm:$0xf]
    %v77 = vld [vmem:[#allocation4 + $0x78] sm:$0xf]
    %v78 = vld [vmem:[#allocation4 + $0x7c] sm:$0xf]
    %v79 = vld [vmem:[#allocation4 + $0x80] sm:$0xf]
    %v80 = vld [vmem:[#allocation4 + $0x84] sm:$0xf]
    %v81 = vld [vmem:[#allocation4 + $0x88] sm:$0x1]
    %v82 = vunpack.c.l.bf16 %v81
    %v83 = vpack.c.bf16 %v64, %v64
    %v100 = vunpack.c.l.b16 %v65
    %v101 = vunpack.c.l.b16 %v66
    %v102 = vunpack.c.l.b16 %v67
    %v103 = vunpack.c.l.b16 %v68
    %v104 = vunpack.c.l.b16 %v69
    %v105 = vunpack.c.l.b16 %v70
    %v106 = vunpack.c.l.b16 %v71
    %v107 = vunpack.c.l.b16 %v72
    %v108 = vunpack.c.l.b16 %v73
    %v109 = vunpack.c.l.b16 %v74
    %v110 = vunpack.c.l.b16 %v75
    %v111 = vunpack.c.l.b16 %v76
    %v112 = vunpack.c.l.b16 %v77
    %v113 = vunpack.c.l.b16 %v78
    %v114 = vunpack.c.l.b16 %v79
    %v115 = vunpack.c.l.b16 %v80
    %v116 = vpack.c.b16 %v101, %v100
    %v117 = vpack.c.b16 %v103, %v102
    %v118 = vpack.c.b16 %v105, %v104
    %v119 = vpack.c.b16 %v107, %v106
    %v120 = vpack.c.b16 %v109, %v108
    %v121 = vpack.c.b16 %v111, %v110
    %v122 = vpack.c.b16 %v113, %v112
    %v123 = vpack.c.b16 %v115, %v114
    %132 = vmatpush.bf16.msra.mxu0 %v123
    %133 = vmatpush.bf16.msra.mxu0 %v122
    %134 = vmatpush.bf16.msra.mxu0 %v121
    %135 = vmatpush.bf16.msra.mxu0 %v120
    %136 = vmatpush.bf16.msra.mxu0 %v119
    %137 = vmatpush.bf16.msra.mxu0 %v118
    %138 = vmatpush.bf16.msra.mxu0 %v117
    %139 = vmatpush.bf16.msra.mxu0 %v116
    %140 = vmatmul.bf16.gmra.mxu0 %v83
    %v141 = vpop.f32.mrf.mxu0
    %v142 = vadd.f32 %v82, %v141
    %v143 = vpop.f32.mrf.mxu0
    %144 = vdwg.mxu0
    %v145 = vmax.f32 %v142, 0.0
    %v146 = vld [vmem:[#allocation4 + $0x90] sm:$0xf]
    %v147 = vld [vmem:[#allocation4 + $0x94] sm:$0xf]
    %v148 = vld [vmem:[#allocation4 + $0x98] sm:$0xf]
    %v149 = vld [vmem:[#allocation4 + $0x9c] sm:$0xf]
    %v150 = vld [vmem:[#allocation4 + $0xa0] sm:$0xf]
    %v151 = vld [vmem:[#allocation4 + $0xa4] sm:$0xf]
    %v152 = vld [vmem:[#allocation4 + $0xa8] sm:$0xf]
    %v153 = vld [vmem:[#allocation4 + $0xac] sm:$0xf]
    %v154 = vld [vmem:[#allocation4 + $0xb0] sm:$0xf]
    %v155 = vld [vmem:[#allocation4 + $0xb4] sm:$0xf]
    %v156 = vld [vmem:[#allocation4 + $0xb8] sm:$0xf]
    %v157 = vld [vmem:[#allocation4 + $0xbc] sm:$0xf]
    %v158 = vld [vmem:[#allocation4 + $0xc0] sm:$0xf]
    %v159 = vld [vmem:[#allocation4 + $0xc4] sm:$0xf]
    %v160 = vld [vmem:[#allocation4 + $0xc8] sm:$0xf]
    %v161 = vld [vmem:[#allocation4 + $0xcc] sm:$0xf]
    %v162 = vld [vmem:[#allocation4 + $0xd0] sm:$0x1]
    %v163 = vunpack.c.l.bf16 %v162
    %v164 = vpack.c.bf16 %v145, %v145
    %v181 = vunpack.c.l.b16 %v146
    %v182 = vunpack.c.l.b16 %v147
    %v183 = vunpack.c.l.b16 %v148
    %v184 = vunpack.c.l.b16 %v149
    %v185 = vunpack.c.l.b16 %v150
    %v186 = vunpack.c.l.b16 %v151
    %v187 = vunpack.c.l.b16 %v152
    %v188 = vunpack.c.l.b16 %v153
    %v189 = vunpack.c.l.b16 %v154
    %v190 = vunpack.c.l.b16 %v155
    %v191 = vunpack.c.l.b16 %v156
    %v192 = vunpack.c.l.b16 %v157
    %v193 = vunpack.c.l.b16 %v158
    %v194 = vunpack.c.l.b16 %v159
    %v195 = vunpack.c.l.b16 %v160
    %v196 = vunpack.c.l.b16 %v161
    %v197 = vpack.c.b16 %v182, %v181
    %v198 = vpack.c.b16 %v184, %v183
    %v199 = vpack.c.b16 %v186, %v185
    %v200 = vpack.c.b16 %v188, %v187
    %v201 = vpack.c.b16 %v190, %v189
    %v202 = vpack.c.b16 %v192, %v191
    %v203 = vpack.c.b16 %v194, %v193
    %v204 = vpack.c.b16 %v196, %v195
    %213 = vmatpush.bf16.msra.mxu0 %v204
    %214 = vmatpush.bf16.msra.mxu0 %v203
    %215 = vmatpush.bf16.msra.mxu0 %v202
    %216 = vmatpush.bf16.msra.mxu0 %v201
    %217 = vmatpush.bf16.msra.mxu0 %v200
    %218 = vmatpush.bf16.msra.mxu0 %v199
    %219 = vmatpush.bf16.msra.mxu0 %v198
    %220 = vmatpush.bf16.msra.mxu0 %v197
    %221 = vmatmul.bf16.gmra.mxu0 %v164
    %v222 = vpop.f32.mrf.mxu0
    %v223 = vadd.f32 %v163, %v222
    %v224 = vpop.f32.mrf.mxu0
    %225 = vdwg.mxu0
    %v226 = vmax.f32 %v223, 0.0
    %v227 = vld [vmem:[#allocation4 + $0xd8] sm:$0xf]
    %v228 = vld [vmem:[#allocation4 + $0xdc] sm:$0xf]
    %v229 = vld [vmem:[#allocation4 + $0xe0] sm:$0xf]
    %v230 = vld [vmem:[#allocation4 + $0xe4] sm:$0xf]
    %v231 = vld [vmem:[#allocation4 + $0xe8] sm:$0xf]
    %v232 = vld [vmem:[#allocation4 + $0xec] sm:$0xf]
    %v233 = vld [vmem:[#allocation4 + $0xf0] sm:$0xf]
    %v234 = vld [vmem:[#allocation4 + $0xf4] sm:$0xf]
    %v235 = vld [vmem:[#allocation4 + $0xf8] sm:$0xf]
    %v236 = vld [vmem:[#allocation4 + $0xfc] sm:$0xf]
    %v237 = vld [vmem:[#allocation4 + $0x100] sm:$0xf]
    %v238 = vld [vmem:[#allocation4 + $0x104] sm:$0xf]
    %v239 = vld [vmem:[#allocation4 + $0x108] sm:$0xf]
    %v240 = vld [vmem:[#allocation4 + $0x10c] sm:$0xf]
    %v241 = vld [vmem:[#allocation4 + $0x110] sm:$0xf]
    %v242 = vld [vmem:[#allocation4 + $0x114] sm:$0xf]
    %v243 = vld [vmem:[#allocation4 + $0x118] sm:$0x1]
    %v244 = vunpack.c.l.bf16 %v243
    %v245 = vpack.c.bf16 %v226, %v226
    %v262 = vunpack.c.l.b16 %v227
    %v263 = vunpack.c.l.b16 %v228
    %v264 = vunpack.c.l.b16 %v229
    %v265 = vunpack.c.l.b16 %v230
    %v266 = vunpack.c.l.b16 %v231
    %v267 = vunpack.c.l.b16 %v232
    %v268 = vunpack.c.l.b16 %v233
    %v269 = vunpack.c.l.b16 %v234
    %v270 = vunpack.c.l.b16 %v235
    %v271 = vunpack.c.l.b16 %v236
    %v272 = vunpack.c.l.b16 %v237
    %v273 = vunpack.c.l.b16 %v238
    %v274 = vunpack.c.l.b16 %v239
    %v275 = vunpack.c.l.b16 %v240
    %v276 = vunpack.c.l.b16 %v241
    %v277 = vunpack.c.l.b16 %v242
    %v278 = vpack.c.b16 %v263, %v262
    %v279 = vpack.c.b16 %v265, %v264
    %v280 = vpack.c.b16 %v267, %v266
    %v281 = vpack.c.b16 %v269, %v268
    %v282 = vpack.c.b16 %v271, %v270
    %v283 = vpack.c.b16 %v273, %v272
    %v284 = vpack.c.b16 %v275, %v274
    %v285 = vpack.c.b16 %v277, %v276
    %294 = vmatpush.bf16.msra.mxu0 %v285
    %295 = vmatpush.bf16.msra.mxu0 %v284
    %296 = vmatpush.bf16.msra.mxu0 %v283
    %297 = vmatpush.bf16.msra.mxu0 %v282
    %298 = vmatpush.bf16.msra.mxu0 %v281
    %299 = vmatpush.bf16.msra.mxu0 %v280
    %300 = vmatpush.bf16.msra.mxu0 %v279
    %301 = vmatpush.bf16.msra.mxu0 %v278
    %302 = vmatmul.bf16.gmra.mxu0 %v245
    %v303 = vpop.f32.mrf.mxu0
    %v304 = vadd.f32 %v244, %v303
    %v305 = vpop.f32.mrf.mxu0
    %306 = vdwg.mxu0
    %v307 = vmax.f32 %v304, 0.0
    %vm308 = vcmask 122880
    %309 = vst.msk [vmem:[%s2] sm:$0x1] %vm308, %v307
    // Predicated region
    $region18: #{kernel_prediction_forward.1} parent=1 // pred_check
      _
    $region19: #{kernel_prediction_forward.1} parent=1 // pred_check_branch
      %311 = sbr.rel (0) target = $region21
    $region20: #{kernel_prediction_forward.1} parent=1 // pred_region
      _
    $region21: #{kernel_prediction_forward.1} parent=1 // pred_fallthru
      _
    // Predicated region
    $region22: #{kernel_prediction_forward.1} parent=1 // pred_check
      _
    $region23: #{kernel_prediction_forward.1} parent=1 // pred_check_branch
      %313 = sbr.rel (0) target = $region25
    $region24: #{kernel_prediction_forward.1} parent=1 // pred_region
      _
    $region25: #{kernel_prediction_forward.1} parent=1 // pred_fallthru
      _
    %314 = vsyncpa [#allocation3], 1
    %315 = vsyncpa [#allocation5], 1

</llo_original>
